<compile_context>
chip_gen: v5e
topology: v5e:2x2
jax: 0.10.0
libtpu: 0.0.40
codegen_flags: <defaults>
</compile_context>

<pallas_src>
import functools

import jax
import jax.numpy as jnp
from jax.experimental import pallas as pl
from jax.experimental.pallas import tpu as pltpu


def _shift_lanes(v, s):
    """Return r with r[..., q] = v[..., (q + s) % L] for a static shift s.

    Implemented as two static lane slices + a concat (lowers to a lane rotation,
    same data movement as pltpu.roll, with unambiguous direction semantics).
    """
    L = v.shape[-1]
    s = s % L
    if s == 0:
        return v
    return jnp.concatenate([v[..., s:], v[..., :s]], axis=-1)


def _flowhead_kernel(x_ref, w1_ref, b1_ref, w2_ref, b2_ref, m_ref, o_ref, *, width):
    # Shapes (one batch element per grid step):
    #   x_ref : (Cin, H*W)      f32   channels on sublanes, flat spatial on lanes
    #   w1_ref: (3, Hid, 3*Cin) bf16  per-dy conv1 weight, the 3 dx taps folded into K
    #   b1_ref: (Hid, 1)        f32
    #   w2_ref: (18, Hid)       bf16  all 9 conv2 taps stacked on the M axis (9 * 2 rows)
    #   b2_ref: (2, 1)          f32
    #   m_ref : (9, H*W)        bf16  per-tap border-validity mask (encodes SAME padding)
    #   o_ref : (2, H*W)              lane-dense output block
    _, hw = x_ref.shape
    hid = b1_ref.shape[0]

    xb = x_ref[...].astype(jnp.bfloat16)      # bf16 MXU operands, f32 accumulation
    masks = m_ref[...]                        # (9, HW) of {0.0, 1.0}

    # ---- conv1: 3 matmuls (one per dy), dx taps folded into K = 3*Cin ----
    acc1 = jnp.zeros((hid, hw), jnp.float32)
    for dy in range(3):
        pieces = []
        for dx in range(3):
            t = dy * 3 + dx
            s = (dy - 1) * width + (dx - 1)        # flat-spatial offset of this tap
            xs = _shift_lanes(xb, s)               # xs[:, q] = x[:, q + s]
            pieces.append(xs * masks[t:t + 1, :])  # zero the out-of-image taps
        xcat = jnp.concatenate(pieces, axis=0)     # (3*Cin, HW) bf16
        acc1 = acc1 + jnp.dot(w1_ref[dy], xcat,
                              preferred_element_type=jnp.float32)
    h = jnp.maximum(acc1 + b1_ref[...], 0.0).astype(jnp.bfloat16)   # (Hid, HW)

    # ---- conv2: one stacked (18, Hid) @ (Hid, HW) matmul, then tiny shift+mask adds ----
    big = jnp.dot(w2_ref[...], h, preferred_element_type=jnp.float32)  # (18, HW) f32
    acc2 = jnp.zeros((2, hw), jnp.float32)
    for dy in range(3):
        for dx in range(3):
            t = dy * 3 + dx
            s = (dy - 1) * width + (dx - 1)
            term = _shift_lanes(big[2 * t:2 * t + 2, :], s)   # (2, HW) — cheap
            acc2 = acc2 + term * masks[t:t + 1, :]
    o_ref[...] = (acc2 + b2_ref[...]).astype(o_ref.dtype)


def flow_head(x_nchw, w1, b1, w2, b2):
    """FlowHead forward. x_nchw: (B, Cin, H, W); w1/w2 in HWIO. Returns (B, 2, H, W)."""
    B, Cin, H, W = x_nchw.shape
    Hid = w1.shape[-1]
    HW = H * W

    # Layout-preserving reshape only (no transpose / pad HBM passes).
    xf = x_nchw.reshape(B, Cin, HW)

    # Tiny one-time weight repacking + bf16 cast (plain JAX glue).
    # w1g[dy][co, dx*Cin + ci] = w1[dy, dx, ci, co]   (dx folded into K)
    w1g = jnp.transpose(w1, (0, 3, 1, 2)).reshape(3, Hid, 3 * Cin).astype(jnp.bfloat16)
    # w2s[(dy*3+dx)*2 + co, hi] = w2[dy, dx, hi, co]  (all taps stacked on M)
    w2s = jnp.transpose(w2, (0, 1, 3, 2)).reshape(18, Hid).astype(jnp.bfloat16)
    b1c = b1.reshape(Hid, 1).astype(jnp.float32)
    b2c = b2.reshape(2, 1).astype(jnp.float32)

    # Per-tap validity masks on the flat spatial axis (SAME zero-padding), {0,1} in bf16.
    ys, xs = jnp.meshgrid(jnp.arange(H), jnp.arange(W), indexing="ij")
    mlist = []
    for dy in range(3):
        for dx in range(3):
            m = ((ys + dy - 1 >= 0) & (ys + dy - 1 < H) &
                 (xs + dx - 1 >= 0) & (xs + dx - 1 < W))
            mlist.append(m.reshape(HW))
    masks = jnp.stack(mlist, axis=0).astype(jnp.bfloat16)   # (9, HW)

    kernel = functools.partial(_flowhead_kernel, width=W)

    out = pl.pallas_call(
        kernel,
        out_shape=jax.ShapeDtypeStruct((B, 2, HW), x_nchw.dtype),
        grid_spec=pltpu.PrefetchScalarGridSpec(
            num_scalar_prefetch=0,
            grid=(B,),
            in_specs=[
                pl.BlockSpec((None, Cin, HW), lambda b: (b, 0, 0)),
                pl.BlockSpec((3, Hid, 3 * Cin), lambda b: (0, 0, 0)),
                pl.BlockSpec((Hid, 1), lambda b: (0, 0)),
                pl.BlockSpec((18, Hid), lambda b: (0, 0)),
                pl.BlockSpec((2, 1), lambda b: (0, 0)),
                pl.BlockSpec((9, HW), lambda b: (0, 0)),
            ],
            out_specs=pl.BlockSpec((None, 2, HW), lambda b: (b, 0, 0)),
        ),
        compiler_params=pltpu.CompilerParams(
            dimension_semantics=("parallel",),
            vmem_limit_bytes=48 * 1024 * 1024,
        ),
    )(xf, w1g, b1c, w2s, b2c, masks)

    return out.reshape(B, 2, H, W)   # free reshape back to NCHW


def _reference_flow_head(x_nchw, w1, b1, w2, b2):
    """Pure-JAX reference (lax conv, f32) for correctness checking."""
    x = jnp.transpose(x_nchw, (0, 2, 3, 1))
    dn = ("NHWC", "HWIO", "NHWC")
    h = jax.lax.conv_general_dilated(x, w1, (1, 1), "SAME",
                                     dimension_numbers=dn) + b1
    h = jnp.maximum(h, 0.0)
    o = jax.lax.conv_general_dilated(h, w2, (1, 1), "SAME",
                                     dimension_numbers=dn) + b2
    return jnp.transpose(o, (0, 3, 1, 2))


if __name__ == "__main__":
    # Small, module-consistent shapes (module defaults 128/256 scaled down).
    B, Cin, Hid, H, W = 2, 16, 32, 16, 16

    key = jax.random.PRNGKey(0)
    kx, kw1, kb1, kw2, kb2 = jax.random.split(key, 5)

    x = jax.random.normal(kx, (B, Cin, H, W), jnp.float32)            # NCHW input
    w1 = jax.random.normal(kw1, (3, 3, Cin, Hid), jnp.float32) * (1.0 / (3 * 3 * Cin) ** 0.5)
    b1 = jax.random.normal(kb1, (Hid,), jnp.float32) * 0.1
    w2 = jax.random.normal(kw2, (3, 3, Hid, 2), jnp.float32) * (1.0 / (3 * 3 * Hid) ** 0.5)
    b2 = jax.random.normal(kb2, (2,), jnp.float32) * 0.1

    out = flow_head(x, w1, b1, w2, b2)
    out = jax.block_until_ready(out)

    ref = _reference_flow_head(x, w1, b1, w2, b2)
    assert out.shape == (B, 2, H, W), out.shape
    # bf16 MXU operands (f32 accumulate) vs f32 reference: expect ~1e-2 abs error;
    # the tolerance below still catches any indexing/shift bug (errors would be O(1)).
    err = float(jnp.max(jnp.abs(out - ref)))
    assert jnp.allclose(out, ref, atol=1e-1, rtol=1e-1), err

    print("KERNEL_OK")
</pallas_src>

<mosaic_0001>
module attributes {stable_mosaic.version = 11 : i64} {
  func.func @_flowhead_kernel(%arg0: i32, %arg1: memref<1x16x256xf32, #tpu.memory_space<vmem>>, %arg2: memref<3x32x48xbf16, #tpu.memory_space<vmem>>, %arg3: memref<32x1xf32, #tpu.memory_space<vmem>>, %arg4: memref<18x32xbf16, #tpu.memory_space<vmem>>, %arg5: memref<2x1xf32, #tpu.memory_space<vmem>>, %arg6: memref<9x256xbf16, #tpu.memory_space<vmem>>, %arg7: memref<1x2x256xf32, #tpu.memory_space<vmem>>) attributes {dimension_semantics = [#tpu.dimension_semantics<parallel>], iteration_bounds = array<i64: 2>, scalar_prefetch = 0 : i64, scratch_operands = 0 : i64, tpu.core_type = #tpu.core_type<tc>, window_params = [{transform_indices = @transform_0, window_bounds = array<i64: 1, 16, 256>}, {pipeline_mode = #tpu.pipeline_mode<synchronous>, transform_indices = @transform_1, window_bounds = array<i64: 3, 32, 48>}, {pipeline_mode = #tpu.pipeline_mode<synchronous>, transform_indices = @transform_2, window_bounds = array<i64: 32, 1>}, {pipeline_mode = #tpu.pipeline_mode<synchronous>, transform_indices = @transform_3, window_bounds = array<i64: 18, 32>}, {pipeline_mode = #tpu.pipeline_mode<synchronous>, transform_indices = @transform_4, window_bounds = array<i64: 2, 1>}, {pipeline_mode = #tpu.pipeline_mode<synchronous>, transform_indices = @transform_5, window_bounds = array<i64: 9, 256>}, {transform_indices = @transform_6, window_bounds = array<i64: 1, 2, 256>}]} {
    %c0 = arith.constant 0 : index
    %c0_0 = arith.constant 0 : index
    %c0_1 = arith.constant 0 : index
    %0 = vector.load %arg1[%c0, %c0_0, %c0_1] : memref<1x16x256xf32, #tpu.memory_space<vmem>>, vector<1x16x256xf32>
    %1 = vector.shape_cast %0 : vector<1x16x256xf32> to vector<16x256xf32>
    %2 = arith.truncf %1 : vector<16x256xf32> to vector<16x256xbf16>
    %c0_2 = arith.constant 0 : index
    %c0_3 = arith.constant 0 : index
    %3 = vector.load %arg6[%c0_2, %c0_3] : memref<9x256xbf16, #tpu.memory_space<vmem>>, vector<9x256xbf16>
    %cst = arith.constant 0.000000e+00 : f32
    %4 = vector.broadcast %cst : f32 to vector<32x256xf32>
    %5 = vector.extract_strided_slice %2 {offsets = [0, 239], sizes = [16, 17], strides = [1, 1]} : vector<16x256xbf16> to vector<16x17xbf16>
    %6 = vector.extract_strided_slice %2 {offsets = [0, 0], sizes = [16, 239], strides = [1, 1]} : vector<16x256xbf16> to vector<16x239xbf16>
    %7 = tpu.concatenate %5, %6 in 1 : vector<16x17xbf16>, vector<16x239xbf16> -> vector<16x256xbf16>
    %8 = vector.extract_strided_slice %3 {offsets = [0, 0], sizes = [1, 256], strides = [1, 1]} : vector<9x256xbf16> to vector<1x256xbf16>
    %9 = vector.broadcast %8 : vector<1x256xbf16> to vector<16x256xbf16>
    %10 = arith.mulf %7, %9 : vector<16x256xbf16>
    %11 = vector.extract_strided_slice %2 {offsets = [0, 240], sizes = [16, 16], strides = [1, 1]} : vector<16x256xbf16> to vector<16x16xbf16>
    %12 = vector.extract_strided_slice %2 {offsets = [0, 0], sizes = [16, 240], strides = [1, 1]} : vector<16x256xbf16> to vector<16x240xbf16>
    %13 = tpu.concatenate %11, %12 in 1 : vector<16x16xbf16>, vector<16x240xbf16> -> vector<16x256xbf16>
    %14 = vector.extract_strided_slice %3 {offsets = [1, 0], sizes = [1, 256], strides = [1, 1]} : vector<9x256xbf16> to vector<1x256xbf16>
    %15 = vector.broadcast %14 : vector<1x256xbf16> to vector<16x256xbf16>
    %16 = arith.mulf %13, %15 : vector<16x256xbf16>
    %17 = vector.extract_strided_slice %2 {offsets = [0, 241], sizes = [16, 15], strides = [1, 1]} : vector<16x256xbf16> to vector<16x15xbf16>
    %18 = vector.extract_strided_slice %2 {offsets = [0, 0], sizes = [16, 241], strides = [1, 1]} : vector<16x256xbf16> to vector<16x241xbf16>
    %19 = tpu.concatenate %17, %18 in 1 : vector<16x15xbf16>, vector<16x241xbf16> -> vector<16x256xbf16>
    %20 = vector.extract_strided_slice %3 {offsets = [2, 0], sizes = [1, 256], strides = [1, 1]} : vector<9x256xbf16> to vector<1x256xbf16>
    %21 = vector.broadcast %20 : vector<1x256xbf16> to vector<16x256xbf16>
    %22 = arith.mulf %19, %21 : vector<16x256xbf16>
    %23 = tpu.concatenate %10, %16, %22 in 0 : vector<16x256xbf16>, vector<16x256xbf16>, vector<16x256xbf16> -> vector<48x256xbf16>
    %c0_4 = arith.constant 0 : index
    %c0_5 = arith.constant 0 : index
    %c0_6 = arith.constant 0 : index
    %24 = vector.load %arg2[%c0_4, %c0_5, %c0_6] : memref<3x32x48xbf16, #tpu.memory_space<vmem>>, vector<1x32x48xbf16>
    %25 = vector.shape_cast %24 : vector<1x32x48xbf16> to vector<32x48xbf16>
    %cst_7 = arith.constant dense<0.000000e+00> : vector<32x256xf32>
    %26 = tpu.matmul %25, %23, %cst_7 {dimension_numbers = #tpu.dot_dimension_numbers<[1], [0], [0], [1], [0, 0, 1, 1], [], []>} : vector<32x48xbf16>, vector<48x256xbf16>, vector<32x256xf32> -> vector<32x256xf32>
    %27 = arith.addf %4, %26 : vector<32x256xf32>
    %28 = vector.extract_strided_slice %2 {offsets = [0, 255], sizes = [16, 1], strides = [1, 1]} : vector<16x256xbf16> to vector<16x1xbf16>
    %29 = vector.extract_strided_slice %2 {offsets = [0, 0], sizes = [16, 255], strides = [1, 1]} : vector<16x256xbf16> to vector<16x255xbf16>
    %30 = tpu.concatenate %28, %29 in 1 : vector<16x1xbf16>, vector<16x255xbf16> -> vector<16x256xbf16>
    %31 = vector.extract_strided_slice %3 {offsets = [3, 0], sizes = [1, 256], strides = [1, 1]} : vector<9x256xbf16> to vector<1x256xbf16>
    %32 = vector.broadcast %31 : vector<1x256xbf16> to vector<16x256xbf16>
    %33 = arith.mulf %30, %32 : vector<16x256xbf16>
    %34 = vector.extract_strided_slice %3 {offsets = [4, 0], sizes = [1, 256], strides = [1, 1]} : vector<9x256xbf16> to vector<1x256xbf16>
    %35 = vector.broadcast %34 : vector<1x256xbf16> to vector<16x256xbf16>
    %36 = arith.mulf %2, %35 : vector<16x256xbf16>
    %37 = vector.extract_strided_slice %2 {offsets = [0, 1], sizes = [16, 255], strides = [1, 1]} : vector<16x256xbf16> to vector<16x255xbf16>
    %38 = vector.extract_strided_slice %2 {offsets = [0, 0], sizes = [16, 1], strides = [1, 1]} : vector<16x256xbf16> to vector<16x1xbf16>
    %39 = tpu.concatenate %37, %38 in 1 : vector<16x255xbf16>, vector<16x1xbf16> -> vector<16x256xbf16>
    %40 = vector.extract_strided_slice %3 {offsets = [5, 0], sizes = [1, 256], strides = [1, 1]} : vector<9x256xbf16> to vector<1x256xbf16>
    %41 = vector.broadcast %40 : vector<1x256xbf16> to vector<16x256xbf16>
    %42 = arith.mulf %39, %41 : vector<16x256xbf16>
    %43 = tpu.concatenate %33, %36, %42 in 0 : vector<16x256xbf16>, vector<16x256xbf16>, vector<16x256xbf16> -> vector<48x256xbf16>
    %c1 = arith.constant 1 : index
    %c0_8 = arith.constant 0 : index
    %c0_9 = arith.constant 0 : index
    %44 = vector.load %arg2[%c1, %c0_8, %c0_9] : memref<3x32x48xbf16, #tpu.memory_space<vmem>>, vector<1x32x48xbf16>
    %45 = vector.shape_cast %44 : vector<1x32x48xbf16> to vector<32x48xbf16>
    %cst_10 = arith.constant dense<0.000000e+00> : vector<32x256xf32>
    %46 = tpu.matmul %45, %43, %cst_10 {dimension_numbers = #tpu.dot_dimension_numbers<[1], [0], [0], [1], [0, 0, 1, 1], [], []>} : vector<32x48xbf16>, vector<48x256xbf16>, vector<32x256xf32> -> vector<32x256xf32>
    %47 = arith.addf %27, %46 : vector<32x256xf32>
    %48 = vector.extract_strided_slice %2 {offsets = [0, 15], sizes = [16, 241], strides = [1, 1]} : vector<16x256xbf16> to vector<16x241xbf16>
    %49 = vector.extract_strided_slice %2 {offsets = [0, 0], sizes = [16, 15], strides = [1, 1]} : vector<16x256xbf16> to vector<16x15xbf16>
    %50 = tpu.concatenate %48, %49 in 1 : vector<16x241xbf16>, vector<16x15xbf16> -> vector<16x256xbf16>
    %51 = vector.extract_strided_slice %3 {offsets = [6, 0], sizes = [1, 256], strides = [1, 1]} : vector<9x256xbf16> to vector<1x256xbf16>
    %52 = vector.broadcast %51 : vector<1x256xbf16> to vector<16x256xbf16>
    %53 = arith.mulf %50, %52 : vector<16x256xbf16>
    %54 = vector.extract_strided_slice %2 {offsets = [0, 16], sizes = [16, 240], strides = [1, 1]} : vector<16x256xbf16> to vector<16x240xbf16>
    %55 = vector.extract_strided_slice %2 {offsets = [0, 0], sizes = [16, 16], strides = [1, 1]} : vector<16x256xbf16> to vector<16x16xbf16>
    %56 = tpu.concatenate %54, %55 in 1 : vector<16x240xbf16>, vector<16x16xbf16> -> vector<16x256xbf16>
    %57 = vector.extract_strided_slice %3 {offsets = [7, 0], sizes = [1, 256], strides = [1, 1]} : vector<9x256xbf16> to vector<1x256xbf16>
    %58 = vector.broadcast %57 : vector<1x256xbf16> to vector<16x256xbf16>
    %59 = arith.mulf %56, %58 : vector<16x256xbf16>
    %60 = vector.extract_strided_slice %2 {offsets = [0, 17], sizes = [16, 239], strides = [1, 1]} : vector<16x256xbf16> to vector<16x239xbf16>
    %61 = vector.extract_strided_slice %2 {offsets = [0, 0], sizes = [16, 17], strides = [1, 1]} : vector<16x256xbf16> to vector<16x17xbf16>
    %62 = tpu.concatenate %60, %61 in 1 : vector<16x239xbf16>, vector<16x17xbf16> -> vector<16x256xbf16>
    %63 = vector.extract_strided_slice %3 {offsets = [8, 0], sizes = [1, 256], strides = [1, 1]} : vector<9x256xbf16> to vector<1x256xbf16>
    %64 = vector.broadcast %63 : vector<1x256xbf16> to vector<16x256xbf16>
    %65 = arith.mulf %62, %64 : vector<16x256xbf16>
    %66 = tpu.concatenate %53, %59, %65 in 0 : vector<16x256xbf16>, vector<16x256xbf16>, vector<16x256xbf16> -> vector<48x256xbf16>
    %c2 = arith.constant 2 : index
    %c0_11 = arith.constant 0 : index
    %c0_12 = arith.constant 0 : index
    %67 = vector.load %arg2[%c2, %c0_11, %c0_12] : memref<3x32x48xbf16, #tpu.memory_space<vmem>>, vector<1x32x48xbf16>
    %68 = vector.shape_cast %67 : vector<1x32x48xbf16> to vector<32x48xbf16>
    %cst_13 = arith.constant dense<0.000000e+00> : vector<32x256xf32>
    %69 = tpu.matmul %68, %66, %cst_13 {dimension_numbers = #tpu.dot_dimension_numbers<[1], [0], [0], [1], [0, 0, 1, 1], [], []>} : vector<32x48xbf16>, vector<48x256xbf16>, vector<32x256xf32> -> vector<32x256xf32>
    %70 = arith.addf %47, %69 : vector<32x256xf32>
    %c0_14 = arith.constant 0 : index
    %c0_15 = arith.constant 0 : index
    %71 = vector.load %arg3[%c0_14, %c0_15] : memref<32x1xf32, #tpu.memory_space<vmem>>, vector<32x1xf32>
    %72 = vector.broadcast %71 : vector<32x1xf32> to vector<32x256xf32>
    %73 = arith.addf %70, %72 : vector<32x256xf32>
    %cst_16 = arith.constant 0.000000e+00 : f32
    %74 = vector.broadcast %cst_16 : f32 to vector<32x256xf32>
    %75 = arith.maximumf %73, %74 : vector<32x256xf32>
    %76 = arith.truncf %75 : vector<32x256xf32> to vector<32x256xbf16>
    %c0_17 = arith.constant 0 : index
    %c0_18 = arith.constant 0 : index
    %77 = vector.load %arg4[%c0_17, %c0_18] : memref<18x32xbf16, #tpu.memory_space<vmem>>, vector<18x32xbf16>
    %cst_19 = arith.constant dense<0.000000e+00> : vector<18x256xf32>
    %78 = tpu.matmul %77, %76, %cst_19 {dimension_numbers = #tpu.dot_dimension_numbers<[1], [0], [0], [1], [0, 0, 1, 1], [], []>} : vector<18x32xbf16>, vector<32x256xbf16>, vector<18x256xf32> -> vector<18x256xf32>
    %cst_20 = arith.constant 0.000000e+00 : f32
    %79 = vector.broadcast %cst_20 : f32 to vector<2x256xf32>
    %80 = vector.extract_strided_slice %78 {offsets = [0, 0], sizes = [2, 256], strides = [1, 1]} : vector<18x256xf32> to vector<2x256xf32>
    %81 = vector.extract_strided_slice %80 {offsets = [0, 239], sizes = [2, 17], strides = [1, 1]} : vector<2x256xf32> to vector<2x17xf32>
    %82 = vector.extract_strided_slice %80 {offsets = [0, 0], sizes = [2, 239], strides = [1, 1]} : vector<2x256xf32> to vector<2x239xf32>
    %83 = tpu.concatenate %81, %82 in 1 : vector<2x17xf32>, vector<2x239xf32> -> vector<2x256xf32>
    %84 = vector.extract_strided_slice %3 {offsets = [0, 0], sizes = [1, 256], strides = [1, 1]} : vector<9x256xbf16> to vector<1x256xbf16>
    %85 = arith.extf %84 : vector<1x256xbf16> to vector<1x256xf32>
    %86 = vector.broadcast %85 : vector<1x256xf32> to vector<2x256xf32>
    %87 = arith.mulf %83, %86 : vector<2x256xf32>
    %88 = arith.addf %79, %87 : vector<2x256xf32>
    %89 = vector.extract_strided_slice %78 {offsets = [2, 0], sizes = [2, 256], strides = [1, 1]} : vector<18x256xf32> to vector<2x256xf32>
    %90 = vector.extract_strided_slice %89 {offsets = [0, 240], sizes = [2, 16], strides = [1, 1]} : vector<2x256xf32> to vector<2x16xf32>
    %91 = vector.extract_strided_slice %89 {offsets = [0, 0], sizes = [2, 240], strides = [1, 1]} : vector<2x256xf32> to vector<2x240xf32>
    %92 = tpu.concatenate %90, %91 in 1 : vector<2x16xf32>, vector<2x240xf32> -> vector<2x256xf32>
    %93 = vector.extract_strided_slice %3 {offsets = [1, 0], sizes = [1, 256], strides = [1, 1]} : vector<9x256xbf16> to vector<1x256xbf16>
    %94 = arith.extf %93 : vector<1x256xbf16> to vector<1x256xf32>
    %95 = vector.broadcast %94 : vector<1x256xf32> to vector<2x256xf32>
    %96 = arith.mulf %92, %95 : vector<2x256xf32>
    %97 = arith.addf %88, %96 : vector<2x256xf32>
    %98 = vector.extract_strided_slice %78 {offsets = [4, 0], sizes = [2, 256], strides = [1, 1]} : vector<18x256xf32> to vector<2x256xf32>
    %99 = vector.extract_strided_slice %98 {offsets = [0, 241], sizes = [2, 15], strides = [1, 1]} : vector<2x256xf32> to vector<2x15xf32>
    %100 = vector.extract_strided_slice %98 {offsets = [0, 0], sizes = [2, 241], strides = [1, 1]} : vector<2x256xf32> to vector<2x241xf32>
    %101 = tpu.concatenate %99, %100 in 1 : vector<2x15xf32>, vector<2x241xf32> -> vector<2x256xf32>
    %102 = vector.extract_strided_slice %3 {offsets = [2, 0], sizes = [1, 256], strides = [1, 1]} : vector<9x256xbf16> to vector<1x256xbf16>
    %103 = arith.extf %102 : vector<1x256xbf16> to vector<1x256xf32>
    %104 = vector.broadcast %103 : vector<1x256xf32> to vector<2x256xf32>
    %105 = arith.mulf %101, %104 : vector<2x256xf32>
    %106 = arith.addf %97, %105 : vector<2x256xf32>
    %107 = vector.extract_strided_slice %78 {offsets = [6, 0], sizes = [2, 256], strides = [1, 1]} : vector<18x256xf32> to vector<2x256xf32>
    %108 = vector.extract_strided_slice %107 {offsets = [0, 255], sizes = [2, 1], strides = [1, 1]} : vector<2x256xf32> to vector<2x1xf32>
    %109 = vector.extract_strided_slice %107 {offsets = [0, 0], sizes = [2, 255], strides = [1, 1]} : vector<2x256xf32> to vector<2x255xf32>
    %110 = tpu.concatenate %108, %109 in 1 : vector<2x1xf32>, vector<2x255xf32> -> vector<2x256xf32>
    %111 = vector.extract_strided_slice %3 {offsets = [3, 0], sizes = [1, 256], strides = [1, 1]} : vector<9x256xbf16> to vector<1x256xbf16>
    %112 = arith.extf %111 : vector<1x256xbf16> to vector<1x256xf32>
    %113 = vector.broadcast %112 : vector<1x256xf32> to vector<2x256xf32>
    %114 = arith.mulf %110, %113 : vector<2x256xf32>
    %115 = arith.addf %106, %114 : vector<2x256xf32>
    %116 = vector.extract_strided_slice %78 {offsets = [8, 0], sizes = [2, 256], strides = [1, 1]} : vector<18x256xf32> to vector<2x256xf32>
    %117 = vector.extract_strided_slice %3 {offsets = [4, 0], sizes = [1, 256], strides = [1, 1]} : vector<9x256xbf16> to vector<1x256xbf16>
    %118 = arith.extf %117 : vector<1x256xbf16> to vector<1x256xf32>
    %119 = vector.broadcast %118 : vector<1x256xf32> to vector<2x256xf32>
    %120 = arith.mulf %116, %119 : vector<2x256xf32>
    %121 = arith.addf %115, %120 : vector<2x256xf32>
    %122 = vector.extract_strided_slice %78 {offsets = [10, 0], sizes = [2, 256], strides = [1, 1]} : vector<18x256xf32> to vector<2x256xf32>
    %123 = vector.extract_strided_slice %122 {offsets = [0, 1], sizes = [2, 255], strides = [1, 1]} : vector<2x256xf32> to vector<2x255xf32>
    %124 = vector.extract_strided_slice %122 {offsets = [0, 0], sizes = [2, 1], strides = [1, 1]} : vector<2x256xf32> to vector<2x1xf32>
    %125 = tpu.concatenate %123, %124 in 1 : vector<2x255xf32>, vector<2x1xf32> -> vector<2x256xf32>
    %126 = vector.extract_strided_slice %3 {offsets = [5, 0], sizes = [1, 256], strides = [1, 1]} : vector<9x256xbf16> to vector<1x256xbf16>
    %127 = arith.extf %126 : vector<1x256xbf16> to vector<1x256xf32>
    %128 = vector.broadcast %127 : vector<1x256xf32> to vector<2x256xf32>
    %129 = arith.mulf %125, %128 : vector<2x256xf32>
    %130 = arith.addf %121, %129 : vector<2x256xf32>
    %131 = vector.extract_strided_slice %78 {offsets = [12, 0], sizes = [2, 256], strides = [1, 1]} : vector<18x256xf32> to vector<2x256xf32>
    %132 = vector.extract_strided_slice %131 {offsets = [0, 15], sizes = [2, 241], strides = [1, 1]} : vector<2x256xf32> to vector<2x241xf32>
    %133 = vector.extract_strided_slice %131 {offsets = [0, 0], sizes = [2, 15], strides = [1, 1]} : vector<2x256xf32> to vector<2x15xf32>
    %134 = tpu.concatenate %132, %133 in 1 : vector<2x241xf32>, vector<2x15xf32> -> vector<2x256xf32>
    %135 = vector.extract_strided_slice %3 {offsets = [6, 0], sizes = [1, 256], strides = [1, 1]} : vector<9x256xbf16> to vector<1x256xbf16>
    %136 = arith.extf %135 : vector<1x256xbf16> to vector<1x256xf32>
    %137 = vector.broadcast %136 : vector<1x256xf32> to vector<2x256xf32>
    %138 = arith.mulf %134, %137 : vector<2x256xf32>
    %139 = arith.addf %130, %138 : vector<2x256xf32>
    %140 = vector.extract_strided_slice %78 {offsets = [14, 0], sizes = [2, 256], strides = [1, 1]} : vector<18x256xf32> to vector<2x256xf32>
    %141 = vector.extract_strided_slice %140 {offsets = [0, 16], sizes = [2, 240], strides = [1, 1]} : vector<2x256xf32> to vector<2x240xf32>
    %142 = vector.extract_strided_slice %140 {offsets = [0, 0], sizes = [2, 16], strides = [1, 1]} : vector<2x256xf32> to vector<2x16xf32>
    %143 = tpu.concatenate %141, %142 in 1 : vector<2x240xf32>, vector<2x16xf32> -> vector<2x256xf32>
    %144 = vector.extract_strided_slice %3 {offsets = [7, 0], sizes = [1, 256], strides = [1, 1]} : vector<9x256xbf16> to vector<1x256xbf16>
    %145 = arith.extf %144 : vector<1x256xbf16> to vector<1x256xf32>
    %146 = vector.broadcast %145 : vector<1x256xf32> to vector<2x256xf32>
    %147 = arith.mulf %143, %146 : vector<2x256xf32>
    %148 = arith.addf %139, %147 : vector<2x256xf32>
    %149 = vector.extract_strided_slice %78 {offsets = [16, 0], sizes = [2, 256], strides = [1, 1]} : vector<18x256xf32> to vector<2x256xf32>
    %150 = vector.extract_strided_slice %149 {offsets = [0, 17], sizes = [2, 239], strides = [1, 1]} : vector<2x256xf32> to vector<2x239xf32>
    %151 = vector.extract_strided_slice %149 {offsets = [0, 0], sizes = [2, 17], strides = [1, 1]} : vector<2x256xf32> to vector<2x17xf32>
    %152 = tpu.concatenate %150, %151 in 1 : vector<2x239xf32>, vector<2x17xf32> -> vector<2x256xf32>
    %153 = vector.extract_strided_slice %3 {offsets = [8, 0], sizes = [1, 256], strides = [1, 1]} : vector<9x256xbf16> to vector<1x256xbf16>
    %154 = arith.extf %153 : vector<1x256xbf16> to vector<1x256xf32>
    %155 = vector.broadcast %154 : vector<1x256xf32> to vector<2x256xf32>
    %156 = arith.mulf %152, %155 : vector<2x256xf32>
    %157 = arith.addf %148, %156 : vector<2x256xf32>
    %c0_21 = arith.constant 0 : index
    %c0_22 = arith.constant 0 : index
    %158 = vector.load %arg5[%c0_21, %c0_22] : memref<2x1xf32, #tpu.memory_space<vmem>>, vector<2x1xf32>
    %159 = vector.broadcast %158 : vector<2x1xf32> to vector<2x256xf32>
    %160 = arith.addf %157, %159 : vector<2x256xf32>
    %c0_23 = arith.constant 0 : index
    %c0_24 = arith.constant 0 : index
    %c0_25 = arith.constant 0 : index
    %161 = vector.load %arg7[%c0_23, %c0_24, %c0_25] : memref<1x2x256xf32, #tpu.memory_space<vmem>>, vector<1x2x256xf32>
    %162 = vector.shape_cast %161 : vector<1x2x256xf32> to vector<2x256xf32>
    %163 = vector.shape_cast %160 : vector<2x256xf32> to vector<1x2x256xf32>
    tpu.vector_store %arg7[%c0_23, %c0_24, %c0_25], %163 {strides = array<i32>} : memref<1x2x256xf32, #tpu.memory_space<vmem>>, vector<1x2x256xf32>,
    return
  }
  func.func @transform_0(%arg0: i32) -> (i32, i32, i32) {
    %c0_i32 = arith.constant 0 : i32
    %c0_i32_0 = arith.constant 0 : i32
    %c0_i32_1 = arith.constant 0 : i32
    return %arg0, %c0_i32, %c0_i32_0 : i32, i32, i32
  }
  func.func @transform_1(%arg0: i32) -> (i32, i32, i32) {
    %c0_i32 = arith.constant 0 : i32
    %c0_i32_0 = arith.constant 0 : i32
    %c0_i32_1 = arith.constant 0 : i32
    %c0_i32_2 = arith.constant 0 : i32
    return %c0_i32, %c0_i32_0, %c0_i32_1 : i32, i32, i32
  }
  func.func @transform_2(%arg0: i32) -> (i32, i32) {
    %c0_i32 = arith.constant 0 : i32
    %c0_i32_0 = arith.constant 0 : i32
    %c0_i32_1 = arith.constant 0 : i32
    return %c0_i32, %c0_i32_0 : i32, i32
  }
  func.func @transform_3(%arg0: i32) -> (i32, i32) {
    %c0_i32 = arith.constant 0 : i32
    %c0_i32_0 = arith.constant 0 : i32
    %c0_i32_1 = arith.constant 0 : i32
    return %c0_i32, %c0_i32_0 : i32, i32
  }
  func.func @transform_4(%arg0: i32) -> (i32, i32) {
    %c0_i32 = arith.constant 0 : i32
    %c0_i32_0 = arith.constant 0 : i32
    %c0_i32_1 = arith.constant 0 : i32
    return %c0_i32, %c0_i32_0 : i32, i32
  }
  func.func @transform_5(%arg0: i32) -> (i32, i32) {
    %c0_i32 = arith.constant 0 : i32
    %c0_i32_0 = arith.constant 0 : i32
    %c0_i32_1 = arith.constant 0 : i32
    return %c0_i32, %c0_i32_0 : i32, i32
  }
  func.func @transform_6(%arg0: i32) -> (i32, i32, i32) {
    %c0_i32 = arith.constant 0 : i32
    %c0_i32_0 = arith.constant 0 : i32
    %c0_i32_1 = arith.constant 0 : i32
    return %arg0, %c0_i32, %c0_i32_0 : i32, i32, i32
  }
}

</mosaic_0001>

<llo_original>
// kernel: tpu_custom_call.1
$region0: #{tpu_custom_call.1}
  #allocation0 [shape = 'u32[]', space=smem, size = 0x4, offset = 0x4, fixed_abs, tag = 'smem constant byte address 0x4 - core index']
  #allocation1 [shape = 'u32[72,128]{1,0:T(1,128)}', space=vmem, size = 0x9000, scoped, tag = 'internal scratch']
  %s0 = inlined_call_operand.hbm [shape: f32[2,16,256], index: 0, kind: input, shape index: {}]
  %s1 = inlined_call_operand.hbm [shape: bf16[3,32,48], index: 1, kind: input, shape index: {}]
  %s2 = inlined_call_operand.vmem [shape: f32[32,1], index: 2, kind: input, shape index: {}]
  %s3 = inlined_call_operand.vmem [shape: bf16[18,32], index: 3, kind: input, shape index: {}]
  %s4 = inlined_call_operand.vmem [shape: f32[2,1], index: 4, kind: input, shape index: {}]
  %s5 = inlined_call_operand.vmem [shape: bf16[9,256], index: 5, kind: input, shape index: {}]
  %s6 = inlined_call_operand.hbm [shape: f32[2,2,256], index: 6, kind: output, shape index: {}]
  %s7 = sld [smem:[#allocation0]]
  $region65: #{tpu_custom_call.1} parent=0
    _
  %s9 = ssub.s32 1, %s7
  %s10 = scalar_select 0, %s9, %s7
  $region1: #{tpu_custom_call.1} parent=0
    #allocation2 [shape = 'u8[32768]{0}', space=vmem, size = 0x8000, scoped, tag = 'input window, operand 0']
    #allocation3 [shape = 's32[2]{0}', space=sflag, size = 0x8, scoped, tag = 'scoped memory for tpu_custom_call.1']
    #allocation4 [shape = 's32[2]{0}', space=sflag, size = 0x8, scoped, tag = 'scoped memory for tpu_custom_call.1']
    #allocation5 [shape = 'u8[24576]{0}', space=vmem, size = 0x6000, scoped, tag = 'input window, operand 1, single buffered']
    #allocation6 [shape = 's32[1]{0}', space=sflag, size = 0x4, scoped, tag = 'scoped memory for tpu_custom_call.1']
    #allocation7 [shape = 'u8[4096]{0}', space=vmem, size = 0x1000, scoped, tag = 'output window, operand 0']
    %11 = vsyncpa [#allocation3], 0
    %s12 = scalar_lea.sflag [#allocation3], 1
    %13 = vsyncpa %s12, 0
    %14 = vsyncpa [#allocation6], 0
    %15 = vsyncpa [#allocation4], 0
    %s16 = scalar_lea.sflag [#allocation4], 1
    %17 = vsyncpa %s16, 0
    loop: start=0, step=1, limit=4
    $region2: #{tpu_custom_call.1} parent=1 // loop_pre_header
      _
    $region3: #{tpu_custom_call.1} parent=1 // loop_header
      %s19 = sphi 0, %s23
      %p20 = scmp.ge.s32.totalorder %s19, 4
      %s29 = sphi 0, %s31
      %s32 = sphi 0, %s29
      %s33 = sphi 0, %s32
      %s49 = sphi 0, %s33
      %s53 = sphi 0, %s53
      %s55 = sphi 0, %s53
      %s56 = sphi 0, %s55
      %s70 = sphi 0, %s56
      %s74 = sphi 0, %s74
      %s76 = sphi 0, %s74
      %s77 = sphi 0, %s76
      %s91 = sphi 0, %s77
      %s95 = sphi 0, %s95
      %s97 = sphi 0, %s95
      %s98 = sphi 0, %s97
      %s112 = sphi 0, %s98
      %s116 = sphi 0, %s116
      %s118 = sphi 0, %s116
      %s119 = sphi 0, %s118
      %s133 = sphi 0, %s119
      %s137 = sphi 0, %s137
      %s139 = sphi 0, %s137
      %s140 = sphi 0, %s139
      %s154 = sphi 0, %s140
      %s160 = sphi 0, %s162
      %s163 = sphi 0, %s160
      %s164 = sphi 0, %s163
      %s180 = sphi 0, %s164
    $region4: #{tpu_custom_call.1} parent=1 // loop_header_branch
      %22 = sbr.rel (%p20) target = $region8
    $region5: #{tpu_custom_call.1} parent=1 // loop_body
      %s24 = ssub.s32 %s19, 1
      %s25 = ssub.s32 %s19, 2
      %s26 = sadd.s32 %s19, 1
      %s27 = ssub.s32 %s19, %s26
      %p28 = scmp.eq.s32.totalorder %s27, 0
      %s30 = sadd.s32 %s29, 1
      %s31 = scalar_select %p28, %s29, %s30
      %p34 = pneg %p28
      %p35 = scmp.eq.s32.totalorder %s19, 1
      %p36 = por %p34, %p35
      %p37 = scmp.ne.s32.totalorder %s29, %s32
      %p38 = scmp.eq.s32.totalorder %s19, 0
      %p39 = por %p37, %p38
      %p40 = scmp.ne.s32.totalorder %s29, %s32
      %p41 = scmp.eq.s32.totalorder %s24, 1
      %p42 = por %p40, %p41
      %p43 = scmp.ne.s32.totalorder %s32, %s33
      %p44 = scmp.eq.s32.totalorder %s24, 0
      %p45 = por %p43, %p44
      %p46 = scmp.ne.s32.totalorder %s32, %s33
      %p47 = scmp.eq.s32.totalorder %s25, 1
      %p48 = por %p46, %p47
      %p50 = scmp.ne.s32.totalorder %s33, %s49
      %p51 = scmp.eq.s32.totalorder %s25, 0
      %p52 = por %p50, %p51
      %s54 = sadd.s32 %s53, 1
      %p57 = scmp.eq.s32.totalorder %s19, 1
      %p58 = scmp.ne.s32.totalorder %s53, %s55
      %p59 = scmp.eq.s32.totalorder %s19, 0
      %p60 = por %p58, %p59
      %p61 = scmp.ne.s32.totalorder %s53, %s55
      %p62 = scmp.eq.s32.totalorder %s24, 1
      %p63 = por %p61, %p62
      %p64 = scmp.ne.s32.totalorder %s55, %s56
      %p65 = scmp.eq.s32.totalorder %s24, 0
      %p66 = por %p64, %p65
      %p67 = scmp.ne.s32.totalorder %s55, %s56
      %p68 = scmp.eq.s32.totalorder %s25, 1
      %p69 = por %p67, %p68
      %p71 = scmp.ne.s32.totalorder %s56, %s70
      %p72 = scmp.eq.s32.totalorder %s25, 0
      %p73 = por %p71, %p72
      %s75 = sadd.s32 %s74, 1
      %p78 = scmp.eq.s32.totalorder %s19, 1
      %p79 = scmp.ne.s32.totalorder %s74, %s76
      %p80 = scmp.eq.s32.totalorder %s19, 0
      %p81 = por %p79, %p80
      %p82 = scmp.ne.s32.totalorder %s74, %s76
      %p83 = scmp.eq.s32.totalorder %s24, 1
      %p84 = por %p82, %p83
      %p85 = scmp.ne.s32.totalorder %s76, %s77
      %p86 = scmp.eq.s32.totalorder %s24, 0
      %p87 = por %p85, %p86
      %p88 = scmp.ne.s32.totalorder %s76, %s77
      %p89 = scmp.eq.s32.totalorder %s25, 1
      %p90 = por %p88, %p89
      %p92 = scmp.ne.s32.totalorder %s77, %s91
      %p93 = scmp.eq.s32.totalorder %s25, 0
      %p94 = por %p92, %p93
      %s96 = sadd.s32 %s95, 1
      %p99 = scmp.eq.s32.totalorder %s19, 1
      %p100 = scmp.ne.s32.totalorder %s95, %s97
      %p101 = scmp.eq.s32.totalorder %s19, 0
      %p102 = por %p100, %p101
      %p103 = scmp.ne.s32.totalorder %s95, %s97
      %p104 = scmp.eq.s32.totalorder %s24, 1
      %p105 = por %p103, %p104
      %p106 = scmp.ne.s32.totalorder %s97, %s98
      %p107 = scmp.eq.s32.totalorder %s24, 0
      %p108 = por %p106, %p107
      %p109 = scmp.ne.s32.totalorder %s97, %s98
      %p110 = scmp.eq.s32.totalorder %s25, 1
      %p111 = por %p109, %p110
      %p113 = scmp.ne.s32.totalorder %s98, %s112
      %p114 = scmp.eq.s32.totalorder %s25, 0
      %p115 = por %p113, %p114
      %s117 = sadd.s32 %s116, 1
      %p120 = scmp.eq.s32.totalorder %s19, 1
      %p121 = scmp.ne.s32.totalorder %s116, %s118
      %p122 = scmp.eq.s32.totalorder %s19, 0
      %p123 = por %p121, %p122
      %p124 = scmp.ne.s32.totalorder %s116, %s118
      %p125 = scmp.eq.s32.totalorder %s24, 1
      %p126 = por %p124, %p125
      %p127 = scmp.ne.s32.totalorder %s118, %s119
      %p128 = scmp.eq.s32.totalorder %s24, 0
      %p129 = por %p127, %p128
      %p130 = scmp.ne.s32.totalorder %s118, %s119
      %p131 = scmp.eq.s32.totalorder %s25, 1
      %p132 = por %p130, %p131
      %p134 = scmp.ne.s32.totalorder %s119, %s133
      %p135 = scmp.eq.s32.totalorder %s25, 0
      %p136 = por %p134, %p135
      %s138 = sadd.s32 %s137, 1
      %p141 = scmp.eq.s32.totalorder %s19, 1
      %p142 = scmp.ne.s32.totalorder %s137, %s139
      %p143 = scmp.eq.s32.totalorder %s19, 0
      %p144 = por %p142, %p143
      %p145 = scmp.ne.s32.totalorder %s137, %s139
      %p146 = scmp.eq.s32.totalorder %s24, 1
      %p147 = por %p145, %p146
      %p148 = scmp.ne.s32.totalorder %s139, %s140
      %p149 = scmp.eq.s32.totalorder %s24, 0
      %p150 = por %p148, %p149
      %p151 = scmp.ne.s32.totalorder %s139, %s140
      %p152 = scmp.eq.s32.totalorder %s25, 1
      %p153 = por %p151, %p152
      %p155 = scmp.ne.s32.totalorder %s140, %s154
      %p156 = scmp.eq.s32.totalorder %s25, 0
      %p157 = por %p155, %p156
      %s158 = ssub.s32 %s19, %s26
      %p159 = scmp.eq.s32.totalorder %s158, 0
      %s161 = sadd.s32 %s160, 1
      %s162 = scalar_select %p159, %s160, %s161
      %p165 = pneg %p159
      %p166 = scmp.eq.s32.totalorder %s19, 1
      %p167 = por %p165, %p166
      %p168 = scmp.ne.s32.totalorder %s160, %s163
      %p169 = scmp.eq.s32.totalorder %s19, 0
      %p170 = por %p168, %p169
      %p171 = scmp.ne.s32.totalorder %s160, %s163
      %p172 = scmp.eq.s32.totalorder %s24, 1
      %p173 = por %p171, %p172
      %p174 = scmp.ne.s32.totalorder %s163, %s164
      %p175 = scmp.eq.s32.totalorder %s24, 0
      %p176 = por %p174, %p175
      %p177 = scmp.ne.s32.totalorder %s163, %s164
      %p178 = scmp.eq.s32.totalorder %s25, 1
      %p179 = por %p177, %p178
      %p181 = scmp.ne.s32.totalorder %s164, %s180
      %p182 = scmp.eq.s32.totalorder %s25, 0
      %p183 = por %p181, %p182
      %p184 = scmp.le.s32.totalorder 1, %s19
      %p185 = scmp.lt.s32.totalorder %s19, 3
      %p186 = pnand %p184, %p185
      %p187 = pneg %p186
      // Predicated region
      $region9: #{tpu_custom_call.1} parent=5 // pred_check
        _
      $region10: #{tpu_custom_call.1} parent=5 // pred_check_branch
        %189 = sbr.rel (%p186) target = $region12
      $region11: #{tpu_custom_call.1} parent=5 // pred_region
        %s190 = ssub.s32 %s19, 1
        // Predicated region
        $region13: #{tpu_custom_call.1} parent=11 // pred_check
          %p191 = pneg %p66
        $region14: #{tpu_custom_call.1} parent=11 // pred_check_branch
          %193 = sbr.rel (%p191) target = $region16
        $region15: #{tpu_custom_call.1} parent=11 // pred_region
          %195 = vsyncadd [#allocation6], 0
          %s196 = sshll.u32 %s1, 4
          %s197 = int_to_ptr.hbm [resolvable:$true] %s196
          %s198 = sshll.u32 [#allocation5], 4
          %s199 = int_to_ptr.vmem [resolvable:$true] %s198
          %204 = dma.hbm_to_vmem [thread:$0]  %s197, 768, %s199, [#allocation6], 64, 64, 4
        $region16: #{tpu_custom_call.1} parent=11 // pred_fallthru
          _
        // Predicated region
        $region17: #{tpu_custom_call.1} parent=11 // pred_check
          %p205 = pneg %p87
        $region18: #{tpu_custom_call.1} parent=11 // pred_check_branch
          %207 = sbr.rel (%p205) target = $region20
        $region19: #{tpu_custom_call.1} parent=11 // pred_region
          _
        $region20: #{tpu_custom_call.1} parent=11 // pred_fallthru
          _
        // Predicated region
        $region21: #{tpu_custom_call.1} parent=11 // pred_check
          %p208 = pneg %p108
        $region22: #{tpu_custom_call.1} parent=11 // pred_check_branch
          %210 = sbr.rel (%p208) target = $region24
        $region23: #{tpu_custom_call.1} parent=11 // pred_region
          _
        $region24: #{tpu_custom_call.1} parent=11 // pred_fallthru
          _
        // Predicated region
        $region25: #{tpu_custom_call.1} parent=11 // pred_check
          %p211 = pneg %p129
        $region26: #{tpu_custom_call.1} parent=11 // pred_check_branch
          %213 = sbr.rel (%p211) target = $region28
        $region27: #{tpu_custom_call.1} parent=11 // pred_region
          _
        $region28: #{tpu_custom_call.1} parent=11 // pred_fallthru
          _
        // Predicated region
        $region29: #{tpu_custom_call.1} parent=11 // pred_check
          %p214 = pneg %p150
        $region30: #{tpu_custom_call.1} parent=11 // pred_check_branch
          %216 = sbr.rel (%p214) target = $region32
        $region31: #{tpu_custom_call.1} parent=11 // pred_region
          _
        $region32: #{tpu_custom_call.1} parent=11 // pred_fallthru
          _
      $region12: #{tpu_custom_call.1} parent=5 // pred_fallthru
        _
      %p217 = scmp.lt.s32.totalorder %s19, 2
      // Predicated region
      $region33: #{tpu_custom_call.1} parent=5 // pred_check
        %p218 = pneg %p217
      $region34: #{tpu_custom_call.1} parent=5 // pred_check_branch
        %220 = sbr.rel (%p218) target = $region36
      $region35: #{tpu_custom_call.1} parent=5 // pred_region
        // Predicated region
        $region37: #{tpu_custom_call.1} parent=35 // pred_check
          %p221 = pneg %p39
        $region38: #{tpu_custom_call.1} parent=35 // pred_check_branch
          %223 = sbr.rel (%p221) target = $region40
        $region39: #{tpu_custom_call.1} parent=35 // pred_region
          %s224 = sand.u32 %s29, 1
          %s225 = scalar_lea.sflag [#allocation3], %s224
          %s226 = sand.u32 %s29, 1
          %s227 = smul.addr %s226, 32
          %s228 = scalar_lea.vmem [#allocation2], %s227
          %230 = vsyncadd %s225, 0
          %s231 = smul.addr %s19, 4
          %s232 = smul.addr %s231, 8
          %s233 = scalar_lea.hbm %s0, %s232
          %s234 = sshll.u32 %s233, 4
          %s235 = int_to_ptr.hbm [resolvable:$true] %s234
          %s236 = sshll.u32 %s228, 4
          %s237 = int_to_ptr.vmem [resolvable:$true] %s236
          %242 = dma.hbm_to_vmem [thread:$0]  %s235, 512, %s237, %s225, 256, 256, 16
        $region40: #{tpu_custom_call.1} parent=35 // pred_fallthru
          _
      $region36: #{tpu_custom_call.1} parent=5 // pred_fallthru
        _
      %p243 = scmp.le.s32.totalorder 1, %s19
      %p244 = scmp.lt.s32.totalorder %s19, 3
      %p245 = pnand %p243, %p244
      %p246 = pneg %p245
      // Predicated region
      $region41: #{tpu_custom_call.1} parent=5 // pred_check
        _
      $region42: #{tpu_custom_call.1} parent=5 // pred_check_branch
        %248 = sbr.rel (%p245) target = $region44
      $region43: #{tpu_custom_call.1} parent=5 // pred_region
        %s249 = ssub.s32 %s19, 1
        %s250 = sand.u32 %s32, 1
        %s251 = scalar_lea.sflag [#allocation3], %s250
        %s252 = sand.u32 %s32, 1
        %s253 = smul.addr %s252, 32
        %s254 = scalar_lea.vmem [#allocation2], %s253
        // Predicated region
        $region45: #{tpu_custom_call.1} parent=43 // pred_check
          %p255 = pneg %p45
        $region46: #{tpu_custom_call.1} parent=43 // pred_check_branch
          %257 = sbr.rel (%p255) target = $region48
        $region47: #{tpu_custom_call.1} parent=43 // pred_region
          %259 = dma.done %s251, 512
        $region48: #{tpu_custom_call.1} parent=43 // pred_fallthru
          _
        // Predicated region
        $region49: #{tpu_custom_call.1} parent=43 // pred_check
          %p260 = pneg %p66
        $region50: #{tpu_custom_call.1} parent=43 // pred_check_branch
          %262 = sbr.rel (%p260) target = $region52
        $region51: #{tpu_custom_call.1} parent=43 // pred_region
          %264 = dma.done [#allocation6], 768
        $region52: #{tpu_custom_call.1} parent=43 // pred_fallthru
          _
        %s265 = sand.u32 %s32, 1
        %s266 = scalar_lea.sflag [#allocation3], %s265
        %s267 = sand.u32 %s32, 1
        %s268 = smul.addr %s267, 32
        %s269 = scalar_lea.vmem [#allocation2], %s268
        %p270 = pneg %p45
        %p271 = pneg %p42
        %p272 = pneg %p66
        %p273 = pneg %p63
        %p274 = pneg %p87
        %p275 = pneg %p84
        %p276 = pneg %p108
        %p277 = pneg %p105
        %p278 = pneg %p129
        %p279 = pneg %p126
        %p280 = pneg %p150
        %p281 = pneg %p147
        %p282 = pneg %p176
        %p283 = pneg %p173
        %s284 = sand.u32 %s163, 1
        %s285 = scalar_lea.sflag [#allocation4], %s284
        %s286 = sand.u32 %s163, 1
        %s287 = smul.addr %s286, 4
        %s288 = scalar_lea.vmem [#allocation7], %s287
        %v290 = vld [vmem:[%s254] sm:$0xff]
        %v291 = vld [vmem:[%s254 + $0x8] sm:$0xff]
        %v292 = vld [vmem:[%s254 + $0x10] sm:$0xff]
        %v293 = vld [vmem:[%s254 + $0x18] sm:$0xff]
        %v294 = vpack.c.bf16 %v291, %v290
        %v295 = vpack.c.bf16 %v293, %v292
        %v296 = vld [vmem:[%s5] sm:$0xff]
        %v297 = vld [vmem:[%s5 + $0x8] sm:$0x11]
        %v300 = vunpack.c.h.b16 %v294
        %v301 = vunpack.c.h.b16 %v295
        %v302 = vpack.c.b16 %v301, %v300
        %303 = vrot.lane.b32.xlu0 %v302, 17
        %v304 = vpop.permute.xlu0 %303
        %v305 = vunpack.c.l.b16 %v294
        %v306 = vunpack.c.l.b16 %v295
        %v307 = vpack.c.b16 %v306, %v305
        %308 = vrot.lane.b32.xlu0 %v307, 17
        %v309 = vpop.permute.xlu0 %308
        %vm310 = vcmask 138240
        %v311 = vsel %vm310, %v309, %v304
        %vm313 = vcmask 138240
        %v316 = vsel %vm313, %v304, %v309
        %v319 = vunpack.c.l.b16 %v296
        %v320 = vunpack.c.h.b16 %v296
        %v321 = vpack.c.b16 %v319, %v319
        %v322 = vpack.c.b16 %v320, %v320
        %v324 = vpack.i.b16 %v321, %v321
        %v326 = vperm.slane %v324, 0
        %v328 = vpack.i.b16 %v322, %v322
        %v330 = vperm.slane %v328, 0
        %v331 = vunpack.c.l.bf16 %v316
        %v332 = vunpack.c.l.bf16 %v311
        %v333 = vunpack.c.h.bf16 %v316
        %v334 = vunpack.c.h.bf16 %v311
        %v335 = vunpack.c.l.bf16 %v326
        %v336 = vunpack.c.l.bf16 %v330
        %v337 = vmul.f32 %v331, %v335
        %v338 = vmul.f32 %v332, %v336
        %v339 = vmul.f32 %v333, %v335
        %v340 = vmul.f32 %v334, %v336
        %v341 = vpack.c.bf16 %v338, %v337
        %v342 = vpack.c.bf16 %v340, %v339
        %343 = vrot.lane.b32.xlu0 %v302, 16
        %v344 = vpop.permute.xlu0 %343
        %345 = vrot.lane.b32.xlu0 %v307, 16
        %v346 = vpop.permute.xlu0 %345
        %vm347 = vcmask 130048
        %v348 = vsel %vm347, %v346, %v344
        %vm350 = vcmask 130048
        %v353 = vsel %vm350, %v344, %v346
        %v355 = vshrl.u32 %v321, 16
        %v356 = vpack.i.b16 %v355, %v355
        %v358 = vperm.slane %v356, 0
        %v359 = vshrl.u32 %v322, 16
        %v360 = vpack.i.b16 %v359, %v359
        %v362 = vperm.slane %v360, 0
        %v363 = vunpack.c.l.bf16 %v353
        %v364 = vunpack.c.l.bf16 %v348
        %v365 = vunpack.c.h.bf16 %v353
        %v366 = vunpack.c.h.bf16 %v348
        %v367 = vunpack.c.l.bf16 %v358
        %v368 = vunpack.c.l.bf16 %v362
        %v369 = vmul.f32 %v363, %v367
        %v370 = vmul.f32 %v364, %v368
        %v371 = vmul.f32 %v365, %v367
        %v372 = vmul.f32 %v366, %v368
        %v373 = vpack.c.bf16 %v370, %v369
        %v374 = vpack.c.bf16 %v372, %v371
        %375 = vrot.lane.b32.xlu0 %v302, 15
        %v376 = vpop.permute.xlu0 %375
        %377 = vrot.lane.b32.xlu0 %v307, 15
        %v378 = vpop.permute.xlu0 %377
        %vm379 = vcmask 121856
        %v380 = vsel %vm379, %v378, %v376
        %vm382 = vcmask 121856
        %v385 = vsel %vm382, %v376, %v378
        %v387 = vperm.slane %v324, 1
        %v388 = vperm.slane %v328, 1
        %v389 = vunpack.c.l.bf16 %v385
        %v390 = vunpack.c.l.bf16 %v380
        %v391 = vunpack.c.h.bf16 %v385
        %v392 = vunpack.c.h.bf16 %v380
        %v393 = vunpack.c.l.bf16 %v387
        %v394 = vunpack.c.l.bf16 %v388
        %v395 = vmul.f32 %v389, %v393
        %v396 = vmul.f32 %v390, %v394
        %v397 = vmul.f32 %v391, %v393
        %v398 = vmul.f32 %v392, %v394
        %v399 = vpack.c.bf16 %v396, %v395
        %v400 = vpack.c.bf16 %v398, %v397
        %v403 = vunpack.c.l.b16 %v341
        %v404 = vunpack.c.h.b16 %v341
        %v405 = vunpack.c.l.b16 %v342
        %v406 = vunpack.c.h.b16 %v342
        %v407 = vpack.c.b16 %v405, %v403
        %v408 = vpack.c.b16 %v406, %v404
        %v413 = vunpack.c.l.b16 %v373
        %v414 = vunpack.c.h.b16 %v373
        %v415 = vunpack.c.l.b16 %v374
        %v416 = vunpack.c.h.b16 %v374
        %v417 = vpack.c.b16 %v415, %v413
        %v418 = vpack.c.b16 %v416, %v414
        %v423 = vunpack.c.l.b16 %v399
        %v424 = vunpack.c.h.b16 %v399
        %v425 = vunpack.c.l.b16 %v400
        %v426 = vunpack.c.h.b16 %v400
        %v427 = vpack.c.b16 %v425, %v423
        %v428 = vpack.c.b16 %v426, %v424
        %v431 = vld [vmem:[#allocation5] sm:$0xf]
        %v432 = vld [vmem:[#allocation5 + $0x4] sm:$0xf]
        %v433 = vld [vmem:[#allocation5 + $0x8] sm:$0xf]
        %v434 = vld [vmem:[#allocation5 + $0xc] sm:$0xf]
        %435 = vrot.lane.b32.xlu0 %v302, 1
        %v436 = vpop.permute.xlu0 %435
        %437 = vrot.lane.b32.xlu0 %v307, 1
        %v438 = vpop.permute.xlu0 %437
        %vm439 = vcmask 7168
        %v440 = vsel %vm439, %v438, %v436
        %vm442 = vcmask 7168
        %v445 = vsel %vm442, %v436, %v438
        %v447 = vperm.slane %v356, 1
        %v448 = vperm.slane %v360, 1
        %v449 = vunpack.c.l.bf16 %v445
        %v450 = vunpack.c.l.bf16 %v440
        %v451 = vunpack.c.h.bf16 %v445
        %v452 = vunpack.c.h.bf16 %v440
        %v453 = vunpack.c.l.bf16 %v447
        %v454 = vunpack.c.l.bf16 %v448
        %v455 = vmul.f32 %v449, %v453
        %v456 = vmul.f32 %v450, %v454
        %v457 = vmul.f32 %v451, %v453
        %v458 = vmul.f32 %v452, %v454
        %v459 = vpack.c.bf16 %v456, %v455
        %v460 = vpack.c.bf16 %v458, %v457
        %v461 = vperm.slane %v324, 2
        %v462 = vperm.slane %v328, 2
        %v463 = vunpack.c.l.bf16 %v294
        %v464 = vunpack.c.h.bf16 %v294
        %v465 = vunpack.c.l.bf16 %v295
        %v466 = vunpack.c.h.bf16 %v295
        %v467 = vunpack.c.l.bf16 %v461
        %v468 = vunpack.c.l.bf16 %v462
        %v469 = vmul.f32 %v463, %v467
        %v470 = vmul.f32 %v464, %v468
        %v471 = vmul.f32 %v465, %v467
        %v472 = vmul.f32 %v466, %v468
        %v473 = vpack.c.bf16 %v470, %v469
        %v474 = vpack.c.bf16 %v472, %v471
        %475 = vrot.lane.b32.xlu0 %v307, 127
        %v476 = vpop.permute.xlu0 %475
        %477 = vrot.lane.b32.xlu0 %v302, 127
        %v478 = vpop.permute.xlu0 %477
        %vm479 = vcmask 1039360
        %v480 = vsel %vm479, %v476, %v478
        %vm482 = vcmask 1039360
        %v485 = vsel %vm482, %v478, %v476
        %v487 = vperm.slane %v356, 2
        %v488 = vperm.slane %v360, 2
        %v489 = vunpack.c.l.bf16 %v480
        %v490 = vunpack.c.l.bf16 %v485
        %v491 = vunpack.c.h.bf16 %v480
        %v492 = vunpack.c.h.bf16 %v485
        %v493 = vunpack.c.l.bf16 %v487
        %v494 = vunpack.c.l.bf16 %v488
        %v495 = vmul.f32 %v489, %v493
        %v496 = vmul.f32 %v490, %v494
        %v497 = vmul.f32 %v491, %v493
        %v498 = vmul.f32 %v492, %v494
        %v499 = vpack.c.bf16 %v496, %v495
        %v500 = vpack.c.bf16 %v498, %v497
        %v503 = vunpack.c.l.b16 %v459
        %v504 = vunpack.c.h.b16 %v459
        %v505 = vunpack.c.l.b16 %v460
        %v506 = vunpack.c.h.b16 %v460
        %v507 = vpack.c.b16 %v505, %v503
        %v508 = vpack.c.b16 %v506, %v504
        %v513 = vunpack.c.l.b16 %v473
        %v514 = vunpack.c.h.b16 %v473
        %v515 = vunpack.c.l.b16 %v474
        %v516 = vunpack.c.h.b16 %v474
        %v517 = vpack.c.b16 %v515, %v513
        %v518 = vpack.c.b16 %v516, %v514
        %v523 = vunpack.c.l.b16 %v499
        %v524 = vunpack.c.h.b16 %v499
        %v525 = vunpack.c.l.b16 %v500
        %v526 = vunpack.c.h.b16 %v500
        %v527 = vpack.c.b16 %v525, %v523
        %v528 = vpack.c.b16 %v526, %v524
        %s531 = scalar_lea.vmem [#allocation5], 16
        %v532 = vld [vmem:[%s531] sm:$0xf]
        %v533 = vld [vmem:[%s531 + $0x4] sm:$0xf]
        %v534 = vld [vmem:[%s531 + $0x8] sm:$0xf]
        %v535 = vld [vmem:[%s531 + $0xc] sm:$0xf]
        %v540 = vunpack.c.l.b16 %v532
        %v541 = vunpack.c.l.b16 %v533
        %v542 = vunpack.c.l.b16 %v534
        %v543 = vunpack.c.l.b16 %v535
        %v544 = vpack.c.b16 %v541, %v540
        %v545 = vpack.c.b16 %v543, %v542
        %vm546 = vcmask 392192
        %v548 = vsel %vm546, %v544, 0
        %v551 = vsel %vm546, %v545, 0
        %553 = vmatpush.bf16.msra.mxu0 0
        %554 = vmatpush.bf16.msra.mxu0 0
        %555 = vmatpush.bf16.msra.mxu0 0
        %556 = vmatpush.bf16.msra.mxu0 0
        %557 = vmatpush.bf16.msra.mxu0 0
        %558 = vmatpush.bf16.msra.mxu0 %v527
        %559 = vmatpush.bf16.msra.mxu0 %v517
        %560 = vmatpush.bf16.msra.mxu0 %v507
        %561 = vmatmul.bf16.gmra.mxu0 %v548
        %v562 = vpop.f32.mrf.mxu0
        %v563 = vadd.f32 0.0, %v562
        %v564 = vpop.f32.mrf.mxu0
        %v565 = vadd.f32 0.0, %v564
        %566 = vmatmul.bf16.gmra.mxu0 %v551
        %v567 = vpop.f32.mrf.mxu0
        %v568 = vadd.f32 0.0, %v567
        %v569 = vpop.f32.mrf.mxu0
        %v570 = vadd.f32 0.0, %v569
        %571 = vdwg.mxu0
        %572 = vmatpush.bf16.msra.mxu0 0
        %573 = vmatpush.bf16.msra.mxu0 0
        %574 = vmatpush.bf16.msra.mxu0 0
        %575 = vmatpush.bf16.msra.mxu0 0
        %576 = vmatpush.bf16.msra.mxu0 0
        %577 = vmatpush.bf16.msra.mxu0 %v528
        %578 = vmatpush.bf16.msra.mxu0 %v518
        %579 = vmatpush.bf16.msra.mxu0 %v508
        %580 = vmatmul.bf16.gmra.mxu0 %v548
        %v581 = vpop.f32.mrf.mxu0
        %v582 = vadd.f32 0.0, %v581
        %v583 = vpop.f32.mrf.mxu0
        %v584 = vadd.f32 0.0, %v583
        %585 = vmatmul.bf16.gmra.mxu0 %v551
        %v586 = vpop.f32.mrf.mxu0
        %v587 = vadd.f32 0.0, %v586
        %v588 = vpop.f32.mrf.mxu0
        %v589 = vadd.f32 0.0, %v588
        %590 = vdwg.mxu0
        %v595 = vunpack.c.l.b16 %v431
        %v596 = vunpack.c.l.b16 %v432
        %v597 = vunpack.c.l.b16 %v433
        %v598 = vunpack.c.l.b16 %v434
        %v599 = vpack.c.b16 %v596, %v595
        %v600 = vpack.c.b16 %v598, %v597
        %v602 = vsel %vm546, %v599, 0
        %v605 = vsel %vm546, %v600, 0
        %607 = vmatpush.bf16.msra.mxu0 0
        %608 = vmatpush.bf16.msra.mxu0 0
        %609 = vmatpush.bf16.msra.mxu0 0
        %610 = vmatpush.bf16.msra.mxu0 0
        %611 = vmatpush.bf16.msra.mxu0 0
        %612 = vmatpush.bf16.msra.mxu0 %v427
        %613 = vmatpush.bf16.msra.mxu0 %v417
        %614 = vmatpush.bf16.msra.mxu0 %v407
        %615 = vmatmul.bf16.gmra.mxu0 %v602
        %v616 = vpop.f32.mrf.mxu0
        %v617 = vadd.f32 %v563, %v616
        %v618 = vpop.f32.mrf.mxu0
        %v619 = vadd.f32 %v565, %v618
        %620 = vmatmul.bf16.gmra.mxu0 %v605
        %v621 = vpop.f32.mrf.mxu0
        %v622 = vadd.f32 %v568, %v621
        %v623 = vpop.f32.mrf.mxu0
        %v624 = vadd.f32 %v570, %v623
        %625 = vdwg.mxu0
        %626 = vmatpush.bf16.msra.mxu0 0
        %627 = vmatpush.bf16.msra.mxu0 0
        %628 = vmatpush.bf16.msra.mxu0 0
        %629 = vmatpush.bf16.msra.mxu0 0
        %630 = vmatpush.bf16.msra.mxu0 0
        %631 = vmatpush.bf16.msra.mxu0 %v428
        %632 = vmatpush.bf16.msra.mxu0 %v418
        %633 = vmatpush.bf16.msra.mxu0 %v408
        %634 = vmatmul.bf16.gmra.mxu0 %v602
        %v635 = vpop.f32.mrf.mxu0
        %v636 = vadd.f32 %v582, %v635
        %v637 = vpop.f32.mrf.mxu0
        %v638 = vadd.f32 %v584, %v637
        %639 = vmatmul.bf16.gmra.mxu0 %v605
        %v640 = vpop.f32.mrf.mxu0
        %v641 = vadd.f32 %v587, %v640
        %v642 = vpop.f32.mrf.mxu0
        %v643 = vadd.f32 %v589, %v642
        %644 = vdwg.mxu0
        %645 = vrot.lane.b32.xlu0 %v307, 113
        %v646 = vpop.permute.xlu0 %645
        %647 = vrot.lane.b32.xlu0 %v302, 113
        %v648 = vpop.permute.xlu0 %647
        %vm649 = vcmask 924672
        %v650 = vsel %vm649, %v646, %v648
        %vm652 = vcmask 924672
        %v655 = vsel %vm652, %v648, %v646
        %v657 = vperm.slane %v324, 3
        %v658 = vperm.slane %v328, 3
        %v659 = vunpack.c.l.bf16 %v650
        %v660 = vunpack.c.l.bf16 %v655
        %v661 = vunpack.c.h.bf16 %v650
        %v662 = vunpack.c.h.bf16 %v655
        %v663 = vunpack.c.l.bf16 %v657
        %v664 = vunpack.c.l.bf16 %v658
        %v665 = vmul.f32 %v659, %v663
        %v666 = vmul.f32 %v660, %v664
        %v667 = vmul.f32 %v661, %v663
        %v668 = vmul.f32 %v662, %v664
        %v669 = vpack.c.bf16 %v666, %v665
        %v670 = vpack.c.bf16 %v668, %v667
        %671 = vrot.lane.b32.xlu0 %v307, 112
        %v672 = vpop.permute.xlu0 %671
        %673 = vrot.lane.b32.xlu0 %v302, 112
        %v674 = vpop.permute.xlu0 %673
        %vm675 = vcmask 916480
        %v676 = vsel %vm675, %v672, %v674
        %vm678 = vcmask 916480
        %v681 = vsel %vm678, %v674, %v672
        %v683 = vperm.slane %v356, 3
        %v684 = vperm.slane %v360, 3
        %v685 = vunpack.c.l.bf16 %v676
        %v686 = vunpack.c.l.bf16 %v681
        %v687 = vunpack.c.h.bf16 %v676
        %v688 = vunpack.c.h.bf16 %v681
        %v689 = vunpack.c.l.bf16 %v683
        %v690 = vunpack.c.l.bf16 %v684
        %v691 = vmul.f32 %v685, %v689
        %v692 = vmul.f32 %v686, %v690
        %v693 = vmul.f32 %v687, %v689
        %v694 = vmul.f32 %v688, %v690
        %v695 = vpack.c.bf16 %v692, %v691
        %v696 = vpack.c.bf16 %v694, %v693
        %697 = vrot.lane.b32.xlu0 %v307, 111
        %v698 = vpop.permute.xlu0 %697
        %699 = vrot.lane.b32.xlu0 %v302, 111
        %v700 = vpop.permute.xlu0 %699
        %vm701 = vcmask 908288
        %v702 = vsel %vm701, %v698, %v700
        %vm704 = vcmask 908288
        %v707 = vsel %vm704, %v700, %v698
        %v710 = vunpack.c.l.b16 %v297
        %v711 = vunpack.c.h.b16 %v297
        %v712 = vpack.c.b16 %v710, %v710
        %v713 = vpack.c.b16 %v711, %v711
        %v715 = vpack.i.b16 %v712, %v712
        %v717 = vperm.slane %v715, 0
        %v719 = vpack.i.b16 %v713, %v713
        %v721 = vperm.slane %v719, 0
        %v722 = vunpack.c.l.bf16 %v702
        %v723 = vunpack.c.l.bf16 %v707
        %v724 = vunpack.c.h.bf16 %v702
        %v725 = vunpack.c.h.bf16 %v707
        %v726 = vunpack.c.l.bf16 %v717
        %v727 = vunpack.c.l.bf16 %v721
        %v728 = vmul.f32 %v722, %v726
        %v729 = vmul.f32 %v723, %v727
        %v730 = vmul.f32 %v724, %v726
        %v731 = vmul.f32 %v725, %v727
        %v732 = vpack.c.bf16 %v729, %v728
        %v733 = vpack.c.bf16 %v731, %v730
        %v736 = vunpack.c.l.b16 %v669
        %v737 = vunpack.c.h.b16 %v669
        %v738 = vunpack.c.l.b16 %v670
        %v739 = vunpack.c.h.b16 %v670
        %v740 = vpack.c.b16 %v738, %v736
        %v741 = vpack.c.b16 %v739, %v737
        %v746 = vunpack.c.l.b16 %v695
        %v747 = vunpack.c.h.b16 %v695
        %v748 = vunpack.c.l.b16 %v696
        %v749 = vunpack.c.h.b16 %v696
        %v750 = vpack.c.b16 %v748, %v746
        %v751 = vpack.c.b16 %v749, %v747
        %v756 = vunpack.c.l.b16 %v732
        %v757 = vunpack.c.h.b16 %v732
        %v758 = vunpack.c.l.b16 %v733
        %v759 = vunpack.c.h.b16 %v733
        %v760 = vpack.c.b16 %v758, %v756
        %v761 = vpack.c.b16 %v759, %v757
        %s764 = scalar_lea.vmem [#allocation5], 32
        %v765 = vld [vmem:[%s764] sm:$0xf]
        %v766 = vld [vmem:[%s764 + $0x4] sm:$0xf]
        %v767 = vld [vmem:[%s764 + $0x8] sm:$0xf]
        %v768 = vld [vmem:[%s764 + $0xc] sm:$0xf]
        %v773 = vunpack.c.l.b16 %v765
        %v774 = vunpack.c.l.b16 %v766
        %v775 = vunpack.c.l.b16 %v767
        %v776 = vunpack.c.l.b16 %v768
        %v777 = vpack.c.b16 %v774, %v773
        %v778 = vpack.c.b16 %v776, %v775
        %v780 = vsel %vm546, %v777, 0
        %v783 = vsel %vm546, %v778, 0
        %785 = vmatpush.bf16.msra.mxu0 0
        %786 = vmatpush.bf16.msra.mxu0 0
        %787 = vmatpush.bf16.msra.mxu0 0
        %788 = vmatpush.bf16.msra.mxu0 0
        %789 = vmatpush.bf16.msra.mxu0 0
        %790 = vmatpush.bf16.msra.mxu0 %v760
        %791 = vmatpush.bf16.msra.mxu0 %v750
        %792 = vmatpush.bf16.msra.mxu0 %v740
        %793 = vmatmul.bf16.gmra.mxu0 %v780
        %v794 = vpop.f32.mrf.mxu0
        %v795 = vadd.f32 0.0, %v794
        %v796 = vpop.f32.mrf.mxu0
        %v797 = vadd.f32 0.0, %v796
        %798 = vmatmul.bf16.gmra.mxu0 %v783
        %v799 = vpop.f32.mrf.mxu0
        %v800 = vadd.f32 0.0, %v799
        %v801 = vpop.f32.mrf.mxu0
        %v802 = vadd.f32 0.0, %v801
        %803 = vdwg.mxu0
        %804 = vmatpush.bf16.msra.mxu0 0
        %805 = vmatpush.bf16.msra.mxu0 0
        %806 = vmatpush.bf16.msra.mxu0 0
        %807 = vmatpush.bf16.msra.mxu0 0
        %808 = vmatpush.bf16.msra.mxu0 0
        %809 = vmatpush.bf16.msra.mxu0 %v761
        %810 = vmatpush.bf16.msra.mxu0 %v751
        %811 = vmatpush.bf16.msra.mxu0 %v741
        %812 = vmatmul.bf16.gmra.mxu0 %v780
        %v813 = vpop.f32.mrf.mxu0
        %v814 = vadd.f32 0.0, %v813
        %v815 = vpop.f32.mrf.mxu0
        %v816 = vadd.f32 0.0, %v815
        %817 = vmatmul.bf16.gmra.mxu0 %v783
        %v818 = vpop.f32.mrf.mxu0
        %v819 = vadd.f32 0.0, %v818
        %v820 = vpop.f32.mrf.mxu0
        %v821 = vadd.f32 0.0, %v820
        %822 = vdwg.mxu0
        %v823 = vadd.f32 %v617, %v795
        %v824 = vadd.f32 %v636, %v814
        %v825 = vadd.f32 %v619, %v797
        %v826 = vadd.f32 %v638, %v816
        %v827 = vadd.f32 %v622, %v800
        %v828 = vadd.f32 %v641, %v819
        %v829 = vadd.f32 %v624, %v802
        %v830 = vadd.f32 %v643, %v821
        %v831 = vld [vmem:[%s2] sm:$0xff]
        %v832 = vld [vmem:[%s2 + $0x8] sm:$0xff]
        %v833 = vld [vmem:[%s2 + $0x10] sm:$0xff]
        %v834 = vld [vmem:[%s2 + $0x18] sm:$0xff]
        %836 = vset.pattern.permute.xlu0 0
        %837 = vperm.xlu0 %836, %v831
        %v838 = vpop.permute.xlu0 %837
        %841 = vset.pattern.permute.xlu0 0
        %842 = vperm.xlu0 %841, %v832
        %v843 = vpop.permute.xlu0 %842
        %846 = vset.pattern.permute.xlu0 0
        %847 = vperm.xlu0 %846, %v833
        %v848 = vpop.permute.xlu0 %847
        %851 = vset.pattern.permute.xlu0 0
        %852 = vperm.xlu0 %851, %v834
        %v853 = vpop.permute.xlu0 %852
        %v855 = vadd.f32 %v823, %v838
        %v856 = vadd.f32 %v824, %v838
        %v857 = vadd.f32 %v825, %v843
        %v858 = vadd.f32 %v826, %v843
        %v859 = vadd.f32 %v827, %v848
        %v860 = vadd.f32 %v828, %v848
        %v861 = vadd.f32 %v829, %v853
        %v862 = vadd.f32 %v830, %v853
        %v863 = vmax.f32 %v855, 0.0
        %v864 = vmax.f32 %v856, 0.0
        %v865 = vmax.f32 %v857, 0.0
        %v866 = vmax.f32 %v858, 0.0
        %v867 = vmax.f32 %v859, 0.0
        %v868 = vmax.f32 %v860, 0.0
        %v869 = vmax.f32 %v861, 0.0
        %v870 = vmax.f32 %v862, 0.0
        %v871 = vpack.c.bf16 %v865, %v863
        %v872 = vpack.c.bf16 %v866, %v864
        %v873 = vpack.c.bf16 %v869, %v867
        %v874 = vpack.c.bf16 %v870, %v868
        %v875 = vld [vmem:[%s3] sm:$0xf]
        %v876 = vld [vmem:[%s3 + $0x4] sm:$0xf]
        %v877 = vld [vmem:[%s3 + $0x8] sm:$0x1]
        %v881 = vunpack.c.l.b16 %v875
        %v882 = vunpack.c.l.b16 %v876
        %v883 = vunpack.c.l.b16 %v877
        %v884 = vpack.c.b16 %v882, %v881
        %v885 = vpack.c.b16 %v883, %v883
        %vm886 = vcmask 261120
        %v888 = vsel %vm886, %v884, 0
        %v891 = vsel %vm886, %v885, 0
        %893 = vmatpush.bf16.msra.mxu0 0
        %894 = vmatpush.bf16.msra.mxu0 0
        %895 = vmatpush.bf16.msra.mxu0 0
        %896 = vmatpush.bf16.msra.mxu0 0
        %897 = vmatpush.bf16.msra.mxu0 0
        %898 = vmatpush.bf16.msra.mxu0 0
        %899 = vmatpush.bf16.msra.mxu0 %v873
        %900 = vmatpush.bf16.msra.mxu0 %v871
        %901 = vmatmul.bf16.gmra.mxu0 %v888
        %v902 = vpop.f32.mrf.mxu0
        %v903 = vadd.f32 0.0, %v902
        %v904 = vpop.f32.mrf.mxu0
        %v905 = vadd.f32 0.0, %v904
        %906 = vmatmul.bf16.gmra.mxu0 %v891
        %v907 = vpop.f32.mrf.mxu0
        %v908 = vadd.f32 0.0, %v907
        %v909 = vpop.f32.mrf.mxu0
        %910 = vdwg.mxu0
        %911 = vmatpush.bf16.msra.mxu0 0
        %912 = vmatpush.bf16.msra.mxu0 0
        %913 = vmatpush.bf16.msra.mxu0 0
        %914 = vmatpush.bf16.msra.mxu0 0
        %915 = vmatpush.bf16.msra.mxu0 0
        %916 = vmatpush.bf16.msra.mxu0 0
        %917 = vmatpush.bf16.msra.mxu0 %v874
        %918 = vmatpush.bf16.msra.mxu0 %v872
        %919 = vmatmul.bf16.gmra.mxu0 %v888
        %v920 = vpop.f32.mrf.mxu0
        %v921 = vadd.f32 0.0, %v920
        %v922 = vpop.f32.mrf.mxu0
        %v923 = vadd.f32 0.0, %v922
        %924 = vmatmul.bf16.gmra.mxu0 %v891
        %v925 = vpop.f32.mrf.mxu0
        %v926 = vadd.f32 0.0, %v925
        %v927 = vpop.f32.mrf.mxu0
        %928 = vdwg.mxu0
        %930 = vrot.lane.b32.xlu0 %v921, 17
        %v931 = vpop.permute.xlu0 %930
        %934 = vrot.lane.b32.xlu0 %v903, 17
        %v935 = vpop.permute.xlu0 %934
        %v936 = vsel %vm313, %v935, %v931
        %v939 = vsel %vm313, %v931, %v935
        %v940 = vunpack.c.l.bf16 %v296
        %v941 = vunpack.c.h.bf16 %v296
        %v942 = vperm.slane %v940, 0
        %v943 = vperm.slane %v941, 0
        %v944 = vmul.f32 %v939, %v942
        %v945 = vmul.f32 %v936, %v943
        %v946 = vadd.f32 %v944, 0.0
        %v947 = vadd.f32 %v945, 0.0
        %948 = vrot.lane.b32.xlu0 %v921, 16
        %v949 = vpop.permute.xlu0 %948
        %951 = vrot.lane.b32.xlu0 %v903, 16
        %v952 = vpop.permute.xlu0 %951
        %v953 = vsel %vm350, %v952, %v949
        %v956 = vsel %vm350, %v949, %v952
        %v957 = vperm.slane %v940, 1
        %v958 = vperm.slane %v941, 1
        %v959 = vmul.f32 %v956, %v957
        %v960 = vmul.f32 %v953, %v958
        %v963 = vrot.slane %v959, 2
        %v964 = vrot.slane %v960, 2
        %v967 = vadd.f32 %v946, %v963
        %v968 = vadd.f32 %v947, %v964
        %969 = vrot.lane.b32.xlu0 %v921, 15
        %v970 = vpop.permute.xlu0 %969
        %972 = vrot.lane.b32.xlu0 %v903, 15
        %v973 = vpop.permute.xlu0 %972
        %v974 = vsel %vm382, %v973, %v970
        %v977 = vsel %vm382, %v970, %v973
        %v978 = vperm.slane %v940, 2
        %v979 = vperm.slane %v941, 2
        %v980 = vmul.f32 %v977, %v978
        %v981 = vmul.f32 %v974, %v979
        %v984 = vrot.slane %v980, 4
        %v985 = vrot.slane %v981, 4
        %v988 = vadd.f32 %v967, %v984
        %v989 = vadd.f32 %v968, %v985
        %990 = vrot.lane.b32.xlu0 %v921, 1
        %v991 = vpop.permute.xlu0 %990
        %993 = vrot.lane.b32.xlu0 %v903, 1
        %v994 = vpop.permute.xlu0 %993
        %v995 = vsel %vm442, %v994, %v991
        %v998 = vsel %vm442, %v991, %v994
        %v999 = vperm.slane %v940, 3
        %v1000 = vperm.slane %v941, 3
        %v1001 = vmul.f32 %v998, %v999
        %v1002 = vmul.f32 %v995, %v1000
        %v1005 = vrot.slane %v1001, 6
        %v1006 = vrot.slane %v1002, 6
        %v1009 = vadd.f32 %v988, %v1005
        %v1010 = vadd.f32 %v989, %v1006
        %v1011 = vperm.slane %v940, 4
        %v1012 = vperm.slane %v941, 4
        %v1013 = vmul.f32 %v905, %v1011
        %v1014 = vmul.f32 %v923, %v1012
        %v1015 = vadd.f32 %v1009, %v1013
        %v1016 = vadd.f32 %v1010, %v1014
        %1019 = vrot.lane.b32.xlu0 %v905, 127
        %v1020 = vpop.permute.xlu0 %1019
        %1021 = vrot.lane.b32.xlu0 %v923, 127
        %v1022 = vpop.permute.xlu0 %1021
        %v1023 = vsel %vm482, %v1020, %v1022
        %v1027 = vsel %vm482, %v1022, %v1020
        %v1028 = vperm.slane %v940, 5
        %v1029 = vperm.slane %v941, 5
        %v1030 = vmul.f32 %v1023, %v1028
        %v1031 = vmul.f32 %v1027, %v1029
        %v1034 = vrot.slane %v1030, 2
        %v1035 = vrot.slane %v1031, 2
        %v1038 = vadd.f32 %v1015, %v1034
        %v1039 = vadd.f32 %v1016, %v1035
        %1040 = vrot.lane.b32.xlu0 %v905, 113
        %v1041 = vpop.permute.xlu0 %1040
        %1042 = vrot.lane.b32.xlu0 %v923, 113
        %v1043 = vpop.permute.xlu0 %1042
        %v1044 = vsel %vm652, %v1041, %v1043
        %v1048 = vsel %vm652, %v1043, %v1041
        %v1049 = vperm.slane %v940, 6
        %v1050 = vperm.slane %v941, 6
        %v1051 = vmul.f32 %v1044, %v1049
        %v1052 = vmul.f32 %v1048, %v1050
        %v1055 = vrot.slane %v1051, 4
        %v1056 = vrot.slane %v1052, 4
        %v1059 = vadd.f32 %v1038, %v1055
        %v1060 = vadd.f32 %v1039, %v1056
        %1061 = vrot.lane.b32.xlu0 %v905, 112
        %v1062 = vpop.permute.xlu0 %1061
        %1063 = vrot.lane.b32.xlu0 %v923, 112
        %v1064 = vpop.permute.xlu0 %1063
        %v1065 = vsel %vm678, %v1062, %v1064
        %v1069 = vsel %vm678, %v1064, %v1062
        %v1070 = vperm.slane %v940, 7
        %v1071 = vperm.slane %v941, 7
        %v1072 = vmul.f32 %v1065, %v1070
        %v1073 = vmul.f32 %v1069, %v1071
        %v1076 = vrot.slane %v1072, 6
        %v1077 = vrot.slane %v1073, 6
        %v1080 = vadd.f32 %v1059, %v1076
        %v1081 = vadd.f32 %v1060, %v1077
        %1084 = vrot.lane.b32.xlu0 %v908, 111
        %v1085 = vpop.permute.xlu0 %1084
        %1086 = vrot.lane.b32.xlu0 %v926, 111
        %v1087 = vpop.permute.xlu0 %1086
        %v1088 = vsel %vm704, %v1085, %v1087
        %v1092 = vsel %vm704, %v1087, %v1085
        %v1093 = vunpack.c.l.bf16 %v297
        %v1094 = vunpack.c.h.bf16 %v297
        %v1095 = vperm.slane %v1093, 0
        %v1096 = vperm.slane %v1094, 0
        %v1097 = vmul.f32 %v1088, %v1095
        %v1098 = vmul.f32 %v1092, %v1096
        %v1099 = vadd.f32 %v1080, %v1097
        %v1100 = vadd.f32 %v1081, %v1098
        %v1101 = vld [vmem:[%s4] sm:$0x3]
        %1103 = vset.pattern.permute.xlu0 0
        %1104 = vperm.xlu0 %1103, %v1101
        %v1105 = vpop.permute.xlu0 %1104
        %v1107 = vadd.f32 %v1099, %v1105
        %v1108 = vadd.f32 %v1100, %v1105
        %v1111 = vrot.slane %v1108, 6
        %vm1112 = vcmask 1041408
        %v1113 = vsel %vm1112, %v1107, %v1111
        %1115 = vst [vmem:[%s288] sm:$0xf] %v1113
        %s1116 = sand.u32 %s163, 1
        %s1117 = scalar_lea.sflag [#allocation4], %s1116
        %s1118 = sand.u32 %s163, 1
        %s1119 = smul.addr %s1118, 4
        %s1120 = scalar_lea.vmem [#allocation7], %s1119
        // Predicated region
        $region53: #{tpu_custom_call.1} parent=43 // pred_check
          %p1121 = pneg %p173
        $region54: #{tpu_custom_call.1} parent=43 // pred_check_branch
          %1123 = sbr.rel (%p1121) target = $region56
        $region55: #{tpu_custom_call.1} parent=43 // pred_region
          %1125 = vsyncadd %s1117, 0
          %s1126 = smul.addr %s24, 2
          %s1127 = smul.addr %s1126, 2
          %s1128 = scalar_lea.hbm %s6, %s1127
          %s1130 = sshll.u32 %s1120, 4
          %s1131 = int_to_ptr.vmem [resolvable:$true] %s1130
          %s1132 = sshll.u32 %s1128, 4
          %s1133 = int_to_ptr.hbm [resolvable:$true] %s1132
          %1135 = dma.vmem_to_hbm [thread:$0]  %s1131, 64, %s1133, %s1117
        $region56: #{tpu_custom_call.1} parent=43 // pred_fallthru
          _
      $region44: #{tpu_custom_call.1} parent=5 // pred_fallthru
        _
      %p1136 = scmp.le.s32.totalorder 2, %s19
      // Predicated region
      $region57: #{tpu_custom_call.1} parent=5 // pred_check
        %p1137 = pneg %p1136
      $region58: #{tpu_custom_call.1} parent=5 // pred_check_branch
        %1139 = sbr.rel (%p1137) target = $region60
      $region59: #{tpu_custom_call.1} parent=5 // pred_region
        %s1140 = ssub.s32 %s19, 2
        // Predicated region
        $region61: #{tpu_custom_call.1} parent=59 // pred_check
          %p1141 = pneg %p179
        $region62: #{tpu_custom_call.1} parent=59 // pred_check_branch
          %1143 = sbr.rel (%p1141) target = $region64
        $region63: #{tpu_custom_call.1} parent=59 // pred_region
          %s1144 = sand.u32 %s164, 1
          %s1145 = scalar_lea.sflag [#allocation4], %s1144
          %s1146 = sand.u32 %s164, 1
          %s1147 = smul.addr %s1146, 4
          %s1148 = scalar_lea.vmem [#allocation7], %s1147
          %1150 = dma.done %s1145, 64
        $region64: #{tpu_custom_call.1} parent=59 // pred_fallthru
          _
      $region60: #{tpu_custom_call.1} parent=5 // pred_fallthru
        _
    $region6: #{tpu_custom_call.1} parent=1 // loop_footer
      %s23 = sadd.s32 1, %s19
    $region7: #{tpu_custom_call.1} parent=1 // loop_footer_branch
      %18 = sbr.rel target = $region3
    $region8: #{tpu_custom_call.1} parent=1 // loop_exit
      _
    %1151 = vsyncpa [#allocation3], 1
    %s1152 = scalar_lea.sflag [#allocation3], 1
    %1153 = vsyncpa %s1152, 1
    %1154 = vsyncpa [#allocation6], 1
    %1155 = vsyncpa [#allocation4], 1
    %s1156 = scalar_lea.sflag [#allocation4], 1
    %1157 = vsyncpa %s1156, 1

</llo_original>
